<compile_context>
chip_gen: v6e
topology: v6e:2x2x1
jax: 0.10.0
libtpu: 0.0.40
codegen_flags: <defaults>
</compile_context>

<pallas_src>
import jax
import jax.numpy as jnp
from jax.experimental import pallas as pl
from jax.experimental.pallas import tpu as pltpu


def _round_up(x, m):
    return ((x + m - 1) // m) * m


def categorical_kernel(x_ref, w_ref, b_ref, logits_ref, probs_ref):
    # Linear: raw = x @ W + b   (MXU matmul, f32 accumulate regardless of x dtype)
    raw = jnp.dot(x_ref[...], w_ref[...],
                  preferred_element_type=jnp.float32) + b_ref[...]
    # torch.distributions.Categorical(logits=...) normalization:
    #   logits <- logits - logsumexp(logits, -1, keepdims=True)
    #   probs  <- softmax(logits)
    m = jnp.max(raw, axis=-1, keepdims=True)
    z = raw - m
    e = jnp.exp(z)                                 # single exp pass (EUP)
    s = jnp.sum(e, axis=-1, keepdims=True)         # XLU row-reduce
    logits_ref[...] = (z - jnp.log(s)).astype(logits_ref.dtype)
    # Exact reciprocal: probs == exp(logits) to f32 precision, rows sum to 1.
    probs_ref[...] = (e * pl.reciprocal(s, approx=False)).astype(probs_ref.dtype)


def _choose_tm(batch, k, n, x_itemsize, tm_max):
    """Batch-tile size: VMEM-safe, and an even (>=2) tile count when batch > tm."""
    lane_n = _round_up(max(n, 1), 128)                 # VMEM lane padding of tiles
    per_row = (2 * k * x_itemsize                      # x, double-buffered
               + 2 * 2 * lane_n * 4                    # two f32 outputs, double-buffered
               + 3 * lane_n * 4)                       # raw/z/e epilogue intermediates
    fixed = (k + 1) * lane_n * 4                       # resident W + bias
    budget = 40 << 20                                  # fits v5e/v6e/v7x physical VMEM
    tm_fit = max(8, ((budget - fixed) // max(per_row, 1)) // 8 * 8)
    tm = max(8, min(tm_max, tm_fit) // 8 * 8)
    if batch <= tm:
        return min(tm, _round_up(batch, 8)), fixed, per_row
    # batch > tm: force an even number of tiles so v7x's 2 TCs stay balanced
    # under dimension_semantics=("parallel",), then re-derive tm.
    n_tiles = _round_up(-(-batch // tm), 2)
    tm = max(8, _round_up(-(-batch // n_tiles), 8))
    return tm, fixed, per_row


def categorical_forward(x, w, b, *, tm_max=4096):
    """x: (B, num_inputs) any float dtype, w: (num_inputs, num_outputs), b: (num_outputs,).

    Returns (normalized_logits, probs), each (B, num_outputs), float32.
    """
    batch, k = x.shape
    num_outputs = w.shape[1]
    b2 = jnp.reshape(b, (1, num_outputs))

    tm, fixed, per_row = _choose_tm(batch, k, num_outputs, x.dtype.itemsize, tm_max)
    grid = (pl.cdiv(batch, tm),)

    # Explicit scoped-VMEM request sized to the actual footprint (+headroom),
    # capped well below v7x's 64 MiB physical per-TC VMEM.
    vmem_limit = int(min(max(fixed + tm * per_row + (2 << 20), 16 << 20), 48 << 20))

    cost = pl.CostEstimate(
        flops=2 * batch * k * num_outputs,
        transcendentals=batch * (num_outputs + 2),      # exp + log + reciprocal
        bytes_accessed=(x.dtype.itemsize * batch * k
                        + w.dtype.itemsize * k * num_outputs
                        + 4 * num_outputs
                        + 2 * 4 * batch * num_outputs),
    )

    out_shape = (
        jax.ShapeDtypeStruct((batch, num_outputs), jnp.float32),
        jax.ShapeDtypeStruct((batch, num_outputs), jnp.float32),
    )
    logits, probs = pl.pallas_call(
        categorical_kernel,
        out_shape=out_shape,
        grid=grid,
        in_specs=[
            pl.BlockSpec((tm, k), lambda i: (i, 0)),             # x: streamed tiles
            pl.BlockSpec((k, num_outputs), lambda i: (0, 0)),    # W: resident (full array)
            pl.BlockSpec((1, num_outputs), lambda i: (0, 0)),    # bias: resident
        ],
        out_specs=(
            pl.BlockSpec((tm, num_outputs), lambda i: (i, 0)),   # true-width outputs
            pl.BlockSpec((tm, num_outputs), lambda i: (i, 0)),
        ),
        compiler_params=pltpu.CompilerParams(
            dimension_semantics=("parallel",),                   # v7x 2-TC sharding
            vmem_limit_bytes=vmem_limit,
        ),
        cost_estimate=cost,
    )(x, w, b2)
    return logits, probs


def init_params(key, num_inputs, num_outputs, gain=0.01):
    """Orthogonal init (gain=0.01) + zero bias, as in the PyTorch module."""
    rows, cols = max(num_inputs, num_outputs), min(num_inputs, num_outputs)
    a = jax.random.normal(key, (rows, cols), dtype=jnp.float32)
    q, r = jnp.linalg.qr(a)
    q = q * jnp.sign(jnp.diagonal(r))        # sign fix as in torch.nn.init.orthogonal_
    if num_inputs >= num_outputs:
        w = q[:num_inputs, :num_outputs]     # (num_inputs, num_outputs)
    else:
        w = q[:num_outputs, :num_inputs].T   # (num_inputs, num_outputs)
    w = gain * w
    b = jnp.zeros((num_outputs,), dtype=jnp.float32)
    return w, b


if __name__ == "__main__":
    key = jax.random.PRNGKey(0)
    kx, kw, kx2 = jax.random.split(key, 3)

    num_inputs = 32
    num_outputs = 8
    w, b = init_params(kw, num_inputs, num_outputs)

    def reference(xx):
        raw = xx.astype(jnp.float32) @ w + jnp.reshape(b, (1, -1))
        lg = raw - jax.scipy.special.logsumexp(raw, axis=-1, keepdims=True)
        return lg, jnp.exp(lg)

    # Case 1: batch divisible by 8.
    x = jax.random.normal(kx, (8, num_inputs), dtype=jnp.float32)
    logits, probs = categorical_forward(x, w, b)
    jax.block_until_ready((logits, probs))
    ref_logits, ref_probs = reference(x)
    assert jnp.allclose(logits, ref_logits, atol=1e-5), "logits mismatch"
    assert jnp.allclose(probs, ref_probs, atol=1e-5), "probs mismatch"
    assert jnp.allclose(jnp.sum(probs, axis=-1), 1.0, atol=1e-5), "probs not normalized"

    # Case 2: ragged batch (exercises the cdiv-grid / masked-store path, no pad copy).
    x2 = jax.random.normal(kx2, (13, num_inputs), dtype=jnp.float32)
    logits2, probs2 = categorical_forward(x2, w, b)
    jax.block_until_ready((logits2, probs2))
    ref_logits2, ref_probs2 = reference(x2)
    assert jnp.allclose(logits2, ref_logits2, atol=1e-5), "ragged logits mismatch"
    assert jnp.allclose(probs2, ref_probs2, atol=1e-5), "ragged probs mismatch"

    # TODO(synk): FixedCategorical.sample()/log_probs()/entropy()/mode() are
    # distribution methods, not part of forward(); they consume the returned
    # logits/probs in plain JAX.
    print("KERNEL_OK")
</pallas_src>

<mosaic_0001>
module attributes {stable_mosaic.version = 11 : i64} {
  func.func @categorical_kernel(%arg0: i32, %arg1: memref<8x32xf32, #tpu.memory_space<vmem>>, %arg2: memref<32x8xf32, #tpu.memory_space<vmem>>, %arg3: memref<1x8xf32, #tpu.memory_space<vmem>>, %arg4: memref<8x8xf32, #tpu.memory_space<vmem>>, %arg5: memref<8x8xf32, #tpu.memory_space<vmem>>) attributes {dimension_semantics = [#tpu.dimension_semantics<parallel>], iteration_bounds = array<i64: 1>, scalar_prefetch = 0 : i64, scratch_operands = 0 : i64, tpu.core_type = #tpu.core_type<tc>, window_params = [{transform_indices = @transform_0, window_bounds = array<i64: 8, 32>}, {pipeline_mode = #tpu.pipeline_mode<synchronous>, transform_indices = @transform_1, window_bounds = array<i64: 32, 8>}, {pipeline_mode = #tpu.pipeline_mode<synchronous>, transform_indices = @transform_2, window_bounds = array<i64: 1, 8>}, {transform_indices = @transform_3, window_bounds = array<i64: 8, 8>}, {transform_indices = @transform_4, window_bounds = array<i64: 8, 8>}]} {
    %c0 = arith.constant 0 : index
    %c0_0 = arith.constant 0 : index
    %0 = vector.load %arg1[%c0, %c0_0] : memref<8x32xf32, #tpu.memory_space<vmem>>, vector<8x32xf32>
    %c0_1 = arith.constant 0 : index
    %c0_2 = arith.constant 0 : index
    %1 = vector.load %arg2[%c0_1, %c0_2] : memref<32x8xf32, #tpu.memory_space<vmem>>, vector<32x8xf32>
    %cst = arith.constant dense<0.000000e+00> : vector<8x8xf32>
    %2 = tpu.matmul %0, %1, %cst {dimension_numbers = #tpu.dot_dimension_numbers<[1], [0], [0], [1], [0, 0, 1, 1], [], []>} : vector<8x32xf32>, vector<32x8xf32>, vector<8x8xf32> -> vector<8x8xf32>
    %c0_3 = arith.constant 0 : index
    %c0_4 = arith.constant 0 : index
    %3 = vector.load %arg3[%c0_3, %c0_4] : memref<1x8xf32, #tpu.memory_space<vmem>>, vector<1x8xf32>
    %4 = vector.broadcast %3 : vector<1x8xf32> to vector<8x8xf32>
    %5 = arith.addf %2, %4 : vector<8x8xf32>
    %cst_5 = arith.constant dense<0xFF800000> : vector<8xf32>
    %6 = vector.multi_reduction <maximumf>, %5, %cst_5 [1] : vector<8x8xf32> to vector<8xf32>
    %7 = vector.shape_cast %6 : vector<8xf32> to vector<8x1xf32>
    %8 = vector.broadcast %7 : vector<8x1xf32> to vector<8x8xf32>
    %9 = arith.subf %5, %8 : vector<8x8xf32>
    %10 = math.exp %9 : vector<8x8xf32>
    %cst_6 = arith.constant dense<0.000000e+00> : vector<8xf32>
    %11 = vector.multi_reduction <add>, %10, %cst_6 [1] : vector<8x8xf32> to vector<8xf32>
    %12 = vector.shape_cast %11 : vector<8xf32> to vector<8x1xf32>
    %13 = math.log %12 : vector<8x1xf32>
    %14 = vector.broadcast %13 : vector<8x1xf32> to vector<8x8xf32>
    %15 = arith.subf %9, %14 : vector<8x8xf32>
    %c0_7 = arith.constant 0 : index
    %c0_8 = arith.constant 0 : index
    %16 = vector.load %arg4[%c0_7, %c0_8] : memref<8x8xf32, #tpu.memory_space<vmem>>, vector<8x8xf32>
    tpu.vector_store %arg4[%c0_7, %c0_8], %15 {strides = array<i32>} : memref<8x8xf32, #tpu.memory_space<vmem>>, vector<8x8xf32>,
    %17 = tpu.reciprocal %12 : vector<8x1xf32> -> vector<8x1xf32>
    %18 = vector.broadcast %17 : vector<8x1xf32> to vector<8x8xf32>
    %19 = arith.mulf %10, %18 : vector<8x8xf32>
    %c0_9 = arith.constant 0 : index
    %c0_10 = arith.constant 0 : index
    %20 = vector.load %arg5[%c0_9, %c0_10] : memref<8x8xf32, #tpu.memory_space<vmem>>, vector<8x8xf32>
    tpu.vector_store %arg5[%c0_9, %c0_10], %19 {strides = array<i32>} : memref<8x8xf32, #tpu.memory_space<vmem>>, vector<8x8xf32>,
    return
  }
  func.func @transform_0(%arg0: i32) -> (i32, i32) {
    %c0_i32 = arith.constant 0 : i32
    %c0_i32_0 = arith.constant 0 : i32
    return %arg0, %c0_i32 : i32, i32
  }
  func.func @transform_1(%arg0: i32) -> (i32, i32) {
    %c0_i32 = arith.constant 0 : i32
    %c0_i32_0 = arith.constant 0 : i32
    %c0_i32_1 = arith.constant 0 : i32
    return %c0_i32, %c0_i32_0 : i32, i32
  }
  func.func @transform_2(%arg0: i32) -> (i32, i32) {
    %c0_i32 = arith.constant 0 : i32
    %c0_i32_0 = arith.constant 0 : i32
    %c0_i32_1 = arith.constant 0 : i32
    return %c0_i32, %c0_i32_0 : i32, i32
  }
  func.func @transform_3(%arg0: i32) -> (i32, i32) {
    %c0_i32 = arith.constant 0 : i32
    %c0_i32_0 = arith.constant 0 : i32
    return %arg0, %c0_i32 : i32, i32
  }
  func.func @transform_4(%arg0: i32) -> (i32, i32) {
    %c0_i32 = arith.constant 0 : i32
    %c0_i32_0 = arith.constant 0 : i32
    return %arg0, %c0_i32 : i32, i32
  }
}

</mosaic_0001>

<llo_original>
// kernel: tpu_custom_call.1
$region0: #{tpu_custom_call.1}
  #allocation0 [shape = 'u32[]', space=smem, size = 0x4, offset = 0x4, fixed_abs, tag = 'smem constant byte address 0x4 - core index']
  #allocation1 [shape = 'u32[144,128]{1,0:T(1,128)}', space=vmem, size = 0x12000, scoped, tag = 'internal scratch']
  %s0 = inlined_call_operand.vmem [shape: f32[8,32], index: 0, kind: input, shape index: {}]
  %s1 = inlined_call_operand.vmem [shape: f32[32,8], index: 1, kind: input, shape index: {}]
  %s2 = inlined_call_operand.vmem [shape: f32[1,8], index: 2, kind: input, shape index: {}]
  %s3 = inlined_call_operand.hbm [shape: f32[8,8], index: 3, kind: output, shape index: {0}]
  %s4 = inlined_call_operand.hbm [shape: f32[8,8], index: 4, kind: output, shape index: {1}]
  %5 = xla_tuple %s3, %s4
  %s6 = sld [smem:[#allocation0]]
  $region30: #{tpu_custom_call.1} parent=0
    _
  %s8 = ssub.s32 1, %s6
  %s9 = scalar_select 0, %s8, %s6
  $region1: #{tpu_custom_call.1} parent=0
    #allocation2 [shape = 'u8[4096]{0}', space=vmem, size = 0x1000, scoped, tag = 'output window, operand 0, single buffered']
    #allocation3 [shape = 's32[1]{0}', space=sflag, size = 0x4, scoped, tag = 'scoped memory for tpu_custom_call.1']
    #allocation4 [shape = 'u8[4096]{0}', space=vmem, size = 0x1000, scoped, tag = 'output window, operand 1, single buffered']
    #allocation5 [shape = 's32[1]{0}', space=sflag, size = 0x4, scoped, tag = 'scoped memory for tpu_custom_call.1']
    %10 = vsyncpa [#allocation3], 0
    %11 = vsyncpa [#allocation5], 0
    // Predicated region
    $region2: #{tpu_custom_call.1} parent=1 // pred_check
      _
    $region3: #{tpu_custom_call.1} parent=1 // pred_check_branch
      %13 = sbr.rel (0) target = $region5
    $region4: #{tpu_custom_call.1} parent=1 // pred_region
      _
    $region5: #{tpu_custom_call.1} parent=1 // pred_fallthru
      _
    // Predicated region
    $region6: #{tpu_custom_call.1} parent=1 // pred_check
      _
    $region7: #{tpu_custom_call.1} parent=1 // pred_check_branch
      %15 = sbr.rel (0) target = $region9
    $region8: #{tpu_custom_call.1} parent=1 // pred_region
      _
    $region9: #{tpu_custom_call.1} parent=1 // pred_fallthru
      _
    // Predicated region
    $region10: #{tpu_custom_call.1} parent=1 // pred_check
      _
    $region11: #{tpu_custom_call.1} parent=1 // pred_check_branch
      %17 = sbr.rel (0) target = $region13
    $region12: #{tpu_custom_call.1} parent=1 // pred_region
      _
    $region13: #{tpu_custom_call.1} parent=1 // pred_fallthru
      _
    %v18 = vld [vmem:[%s0] sm:$0xff]
    %v19 = vld [vmem:[%s1] sm:$0xff]
    %v20 = vld [vmem:[%s1 + $0x8] sm:$0xff]
    %v21 = vld [vmem:[%s1 + $0x10] sm:$0xff]
    %v22 = vld [vmem:[%s1 + $0x18] sm:$0xff]
    %v23 = vld [vmem:[%s2] sm:$0x1]
    %v25 = vlaneseq
    %v26 = vshrl.u32 %v25, 7
    %v27 = vsub.s32 0, %v26
    %v28 = vrot.slane %v23, %v27
    %vm30 = vcmask 261120
    %v32 = vsel %vm30, %v18, 0
    %34 = vmatprep.subr.mxu0 0.0
    %35 = vmatpush1.msra.mxu0 0.0
    %36 = vmatprep.subr.mxu0 0.0
    %37 = vmatpush1.msra.mxu0 0.0
    %38 = vmatprep.subr.mxu0 0.0
    %39 = vmatpush1.msra.mxu0 0.0
    %40 = vmatprep.subr.mxu0 0.0
    %41 = vmatpush1.msra.mxu0 0.0
    %42 = vmatprep.subr.mxu0 0.0
    %43 = vmatpush1.msra.mxu0 0.0
    %44 = vmatprep.subr.mxu0 0.0
    %45 = vmatpush1.msra.mxu0 0.0
    %46 = vmatprep.subr.mxu0 0.0
    %47 = vmatpush1.msra.mxu0 0.0
    %48 = vmatprep.subr.mxu0 0.0
    %49 = vmatpush1.msra.mxu0 0.0
    %50 = vmatprep.subr.mxu0 0.0
    %51 = vmatpush1.msra.mxu0 0.0
    %52 = vmatprep.subr.mxu0 0.0
    %53 = vmatpush1.msra.mxu0 0.0
    %54 = vmatprep.subr.mxu0 0.0
    %55 = vmatpush1.msra.mxu0 0.0
    %56 = vmatprep.subr.mxu0 0.0
    %57 = vmatpush1.msra.mxu0 0.0
    %58 = vmatprep.subr.mxu0 0.0
    %59 = vmatpush1.msra.mxu0 %v22
    %60 = vmatprep.subr.mxu0 0.0
    %61 = vmatpush1.msra.mxu0 %v21
    %62 = vmatprep.subr.mxu0 0.0
    %63 = vmatpush1.msra.mxu0 %v20
    %64 = vmatprep.subr.mxu0 0.0
    %65 = vmatpush1.msra.mxu0 %v19
    %66 = vmatprep.subr.mxu0 0.0
    %67 = vmatpush2.msra.mxu0 0.0
    %68 = vmatprep.subr.mxu0 0.0
    %69 = vmatpush2.msra.mxu0 0.0
    %70 = vmatprep.subr.mxu0 0.0
    %71 = vmatpush2.msra.mxu0 0.0
    %72 = vmatprep.subr.mxu0 0.0
    %73 = vmatpush2.msra.mxu0 0.0
    %74 = vmatprep.subr.mxu0 0.0
    %75 = vmatpush2.msra.mxu0 0.0
    %76 = vmatprep.subr.mxu0 0.0
    %77 = vmatpush2.msra.mxu0 0.0
    %78 = vmatprep.subr.mxu0 0.0
    %79 = vmatpush2.msra.mxu0 0.0
    %80 = vmatprep.subr.mxu0 0.0
    %81 = vmatpush2.msra.mxu0 0.0
    %82 = vmatprep.subr.mxu0 0.0
    %83 = vmatpush2.msra.mxu0 0.0
    %84 = vmatprep.subr.mxu0 0.0
    %85 = vmatpush2.msra.mxu0 0.0
    %86 = vmatprep.subr.mxu0 0.0
    %87 = vmatpush2.msra.mxu0 0.0
    %88 = vmatprep.subr.mxu0 0.0
    %89 = vmatpush2.msra.mxu0 0.0
    %90 = vmatprep.subr.mxu0 0.0
    %91 = vmatpush2.msra.mxu0 0.0
    %92 = vmatprep.subr.mxu0 0.0
    %93 = vmatpush2.msra.mxu0 0.0
    %94 = vmatprep.subr.mxu0 0.0
    %95 = vmatpush2.msra.mxu0 0.0
    %96 = vmatprep.subr.mxu0 0.0
    %97 = vmatpush2.msra.mxu0 0.0
    %98 = vmatprep.mubr.f32.mxu0 0.0
    %99 = vmatmul.mubr.f32.gmra.mxu0 %v32
    %v100 = vpop.f32.mrf.mxu0
    %v101 = vadd.f32 %v28, %v100
    %v102 = vpop.f32.mrf.mxu0
    %103 = vdwg.mxu0
    %vm104 = vcmask 64512
    %v105 = vsel %vm104, %v101, -inf
    %106 = vmax.xlane.f32.xlu0 %v105
    %v107 = vpop.xlane.xlu0 %106
    %v108 = vsub.f32 %v101, %v107
    %v109 = vmul.f32 %v108, 1.442695
    %v110 = vpow.pop %v109
    %v111 = vsel %vm104, %v110, 0.0
    %112 = vadd.xlane.f32.xlu0 %v111
    %v113 = vpop.xlane.xlu0 %112
    %v114 = vlog2.pop %v113
    %v115 = vmul.f32 %v114, 0.6931472
    %v116 = vsub.f32 %v108, %v115
    %117 = vst.msk [vmem:[#allocation2] sm:$0xff] %vm104, %v116
    %v118 = vrcp.pop %v113
    %v119 = vmul.f32 %v110, %v118
    %120 = vst.msk [vmem:[#allocation4] sm:$0xff] %vm104, %v119
    // Predicated region
    $region14: #{tpu_custom_call.1} parent=1 // pred_check
      _
    $region15: #{tpu_custom_call.1} parent=1 // pred_check_branch
      %122 = sbr.rel (0) target = $region17
    $region16: #{tpu_custom_call.1} parent=1 // pred_region
      %s124 = ssub.s32 128, 128
      %125 = vsyncadd [#allocation3], %s124
      %s127 = sshll.u32 [#allocation2], 4
      %s128 = int_to_ptr.vmem [resolvable:$true] %s127
      %130 = dma.vmem_to_hbm [thread:$0]  %s128, 128, %s3, [#allocation3]
    $region17: #{tpu_custom_call.1} parent=1 // pred_fallthru
      _
    // Predicated region
    $region18: #{tpu_custom_call.1} parent=1 // pred_check
      _
    $region19: #{tpu_custom_call.1} parent=1 // pred_check_branch
      %132 = sbr.rel (0) target = $region21
    $region20: #{tpu_custom_call.1} parent=1 // pred_region
      %s134 = ssub.s32 128, 128
      %135 = vsyncadd [#allocation5], %s134
      %s137 = sshll.u32 [#allocation4], 4
      %s138 = int_to_ptr.vmem [resolvable:$true] %s137
      %140 = dma.vmem_to_hbm [thread:$0]  %s138, 128, %s4, [#allocation5]
    $region21: #{tpu_custom_call.1} parent=1 // pred_fallthru
      _
    // Predicated region
    $region22: #{tpu_custom_call.1} parent=1 // pred_check
      _
    $region23: #{tpu_custom_call.1} parent=1 // pred_check_branch
      %142 = sbr.rel (0) target = $region25
    $region24: #{tpu_custom_call.1} parent=1 // pred_region
      %143 = dma.done [#allocation3], 128
    $region25: #{tpu_custom_call.1} parent=1 // pred_fallthru
      _
    // Predicated region
    $region26: #{tpu_custom_call.1} parent=1 // pred_check
      _
    $region27: #{tpu_custom_call.1} parent=1 // pred_check_branch
      %145 = sbr.rel (0) target = $region29
    $region28: #{tpu_custom_call.1} parent=1 // pred_region
      %146 = dma.done [#allocation5], 128
    $region29: #{tpu_custom_call.1} parent=1 // pred_fallthru
      _
    %147 = vsyncpa [#allocation3], 1
    %148 = vsyncpa [#allocation5], 1

</llo_original>
